<compile_context>
chip_gen: v5e
topology: v5e:2x2
jax: 0.10.0
libtpu: 0.0.40
codegen_flags: <defaults>
</compile_context>

<pallas_src>
import jax
import jax.numpy as jnp
import jax.scipy.linalg
from jax.experimental import pallas as pl
from jax.experimental.pallas import tpu as pltpu

PACK = 8  # original rows packed per lane-dense super-row


def linear_add_relu_kernel(x1_ref, w_ref, b_ref, x2_ref, o_ref):
    # x1_ref: (TB, 128), w_ref: (128, 256) block-diag, b_ref: (1, 256), x2_ref: (TB, 256)
    v1 = jnp.dot(x1_ref[...], w_ref[...], preferred_element_type=jnp.float32)
    v2 = v1 + b_ref[...] + x2_ref[...]
    o_ref[...] = jnp.maximum(v2, 0.0).astype(o_ref.dtype)


def linear_add_relu(x1, x2, weight, bias, *, batch_tile=8192):
    """weight is PyTorch-style (out_f, in_f); bias is (out_f,)."""
    B, in_f = x1.shape
    out_f = weight.shape[0]
    assert x2.shape == (B, out_f)

    # --- Lane-dense repack (done once in the XLA graph, outside the kernel) ---
    # Block-diagonal weight: (PACK*in_f, PACK*out_f) = (128, 256).
    w_t = weight.T.astype(jnp.float32)                       # (16, 32)
    w_bd = jax.scipy.linalg.block_diag(*([w_t] * PACK))      # (128, 256)
    bias_p = jnp.tile(bias.astype(jnp.float32), PACK)[None, :]  # (1, 256)

    kp = PACK * in_f    # 128
    np_ = PACK * out_f  # 256

    max_row_tile = max(8, batch_tile // PACK)   # tile in packed rows
    rows_needed = -(-B // PACK)                 # cdiv(B, PACK)

    if rows_needed <= max_row_tile:
        # Small problem: single gridless call, everything resident in VMEM.
        grid = None
        tile = None
        rows = rows_needed
    else:
        # Keep >= ~8 grid steps when possible (v7x: 2 TCs, >=4 steps/core),
        # tile must be a multiple of 8 sublanes.
        tile = min(max_row_tile, -(-rows_needed // 8))
        tile = max(8, ((tile + 7) // 8) * 8)
        tile = min(tile, max_row_tile)
        grid = (-(-rows_needed // tile),)
        rows = grid[0] * tile

    # Zero-pad the batch up to the packed/tiled row count (padding rows are
    # sliced off at the end; their garbage value relu(bias) is never returned).
    Bp = rows * PACK
    if Bp != B:
        x1 = jnp.pad(x1, ((0, Bp - B), (0, 0)))
        x2 = jnp.pad(x2, ((0, Bp - B), (0, 0)))
    x1p = x1.reshape(rows, kp)   # contiguous reshape, free
    x2p = x2.reshape(rows, np_)

    out_shape = jax.ShapeDtypeStruct((rows, np_), jnp.float32)

    if grid is None:
        outp = pl.pallas_call(
            linear_add_relu_kernel,
            out_shape=out_shape,
            in_specs=[pl.BlockSpec(memory_space=pltpu.MemorySpace.VMEM)] * 4,
            out_specs=pl.BlockSpec(memory_space=pltpu.MemorySpace.VMEM),
        )(x1p, w_bd, bias_p, x2p)
    else:
        outp = pl.pallas_call(
            linear_add_relu_kernel,
            out_shape=out_shape,
            grid=grid,
            in_specs=[
                # streamed inputs: 3-deep buffering (pipeline is back-to-back DMAs)
                pl.BlockSpec((tile, kp), lambda i: (i, 0),
                             pipeline_mode=pl.Buffered(3)),
                # weight / bias stay resident across all steps
                pl.BlockSpec((kp, np_), lambda i: (0, 0)),
                pl.BlockSpec((1, np_), lambda i: (0, 0)),
                pl.BlockSpec((tile, np_), lambda i: (i, 0),
                             pipeline_mode=pl.Buffered(3)),
            ],
            out_specs=pl.BlockSpec((tile, np_), lambda i: (i, 0)),
            compiler_params=pltpu.CompilerParams(
                dimension_semantics=("parallel",),   # batch axis -> megacore
                vmem_limit_bytes=32 << 20,           # headroom for large tiles (v5e default is 16 MiB)
            ),
        )(x1p, w_bd, bias_p, x2p)

    return outp.reshape(Bp, out_f)[:B]


def reference(x1, x2, weight, bias):
    return jnp.maximum(x1 @ weight.T + bias + x2, 0.0)


if __name__ == "__main__":
    key = jax.random.PRNGKey(0)
    k1, k2, k3, k4, k5, k6 = jax.random.split(key, 6)

    B, IN, OUT = 8, 16, 32
    x1 = jax.random.normal(k1, (B, IN), dtype=jnp.float32)
    x2 = jax.random.normal(k2, (B, OUT), dtype=jnp.float32)

    # Deterministic parameter init (matches nn.Linear shapes: W (32,16), b (32,))
    bound = 1.0 / jnp.sqrt(IN)
    weight = jax.random.uniform(k3, (OUT, IN), dtype=jnp.float32,
                                minval=-bound, maxval=bound)
    bias = jax.random.uniform(k4, (OUT,), dtype=jnp.float32,
                              minval=-bound, maxval=bound)

    # Module-sized problem (B=8): gridless VMEM-resident path.
    out = linear_add_relu(x1, x2, weight, bias)
    out = jax.block_until_ready(out)
    ref = reference(x1, x2, weight, bias)
    assert out.shape == (B, OUT)
    assert jnp.allclose(out, ref, atol=1e-5, rtol=1e-5), "small-batch mismatch"

    # Also exercise the batch-tiled ("parallel") path, including a B that is
    # NOT a multiple of the tile (hits the zero-padding logic).
    BL = 20000
    x1l = jax.random.normal(k5, (BL, IN), dtype=jnp.float32)
    x2l = jax.random.normal(k6, (BL, OUT), dtype=jnp.float32)
    outl = linear_add_relu(x1l, x2l, weight, bias, batch_tile=8192)
    outl = jax.block_until_ready(outl)
    refl = reference(x1l, x2l, weight, bias)
    assert outl.shape == (BL, OUT)
    assert jnp.allclose(outl, refl, atol=1e-5, rtol=1e-5), "tiled-batch mismatch"

    print("KERNEL_OK")
</pallas_src>

<mosaic_0001>
module attributes {stable_mosaic.version = 11 : i64} {
  func.func @linear_add_relu_kernel(%arg0: memref<1x128xf32, #tpu.memory_space<vmem>>, %arg1: memref<128x256xf32, #tpu.memory_space<vmem>>, %arg2: memref<1x256xf32, #tpu.memory_space<vmem>>, %arg3: memref<1x256xf32, #tpu.memory_space<vmem>>, %arg4: memref<1x256xf32, #tpu.memory_space<vmem>>) attributes {dimension_semantics = [], scalar_prefetch = 0 : i64, scratch_operands = 0 : i64, tpu.core_type = #tpu.core_type<tc>} {
    %c0 = arith.constant 0 : index
    %c0_0 = arith.constant 0 : index
    %0 = vector.load %arg0[%c0, %c0_0] : memref<1x128xf32, #tpu.memory_space<vmem>>, vector<1x128xf32>
    %c0_1 = arith.constant 0 : index
    %c0_2 = arith.constant 0 : index
    %1 = vector.load %arg1[%c0_1, %c0_2] : memref<128x256xf32, #tpu.memory_space<vmem>>, vector<128x256xf32>
    %cst = arith.constant dense<0.000000e+00> : vector<1x256xf32>
    %2 = tpu.matmul %0, %1, %cst {dimension_numbers = #tpu.dot_dimension_numbers<[1], [0], [0], [1], [0, 0, 1, 1], [], []>} : vector<1x128xf32>, vector<128x256xf32>, vector<1x256xf32> -> vector<1x256xf32>
    %c0_3 = arith.constant 0 : index
    %c0_4 = arith.constant 0 : index
    %3 = vector.load %arg2[%c0_3, %c0_4] : memref<1x256xf32, #tpu.memory_space<vmem>>, vector<1x256xf32>
    %4 = arith.addf %2, %3 : vector<1x256xf32>
    %c0_5 = arith.constant 0 : index
    %c0_6 = arith.constant 0 : index
    %5 = vector.load %arg3[%c0_5, %c0_6] : memref<1x256xf32, #tpu.memory_space<vmem>>, vector<1x256xf32>
    %6 = arith.addf %4, %5 : vector<1x256xf32>
    %cst_7 = arith.constant 0.000000e+00 : f32
    %7 = vector.broadcast %cst_7 : f32 to vector<1x256xf32>
    %8 = arith.maximumf %6, %7 : vector<1x256xf32>
    %c0_8 = arith.constant 0 : index
    %c0_9 = arith.constant 0 : index
    %9 = vector.load %arg4[%c0_8, %c0_9] : memref<1x256xf32, #tpu.memory_space<vmem>>, vector<1x256xf32>
    tpu.vector_store %arg4[%c0_8, %c0_9], %8 {strides = array<i32>} : memref<1x256xf32, #tpu.memory_space<vmem>>, vector<1x256xf32>,
    return
  }
}

</mosaic_0001>

<llo_original>
// kernel: tpu_custom_call.1
$region0: #{tpu_custom_call.1}
  #allocation0 [shape = 'u32[]', space=smem, size = 0x4, offset = 0x4, fixed_abs, tag = 'smem constant byte address 0x4 - core index']
  #allocation1 [shape = 'u32[72,128]{1,0:T(1,128)}', space=vmem, size = 0x9000, scoped, tag = 'internal scratch']
  %s0 = inlined_call_operand.hbm [shape: f32[1,128], index: 0, kind: input, shape index: {}]
  %s1 = inlined_call_operand.hbm [shape: f32[128,256], index: 1, kind: input, shape index: {}]
  %s2 = inlined_call_operand.hbm [shape: f32[1,256], index: 2, kind: input, shape index: {}]
  %s3 = inlined_call_operand.vmem [shape: f32[1,256], index: 3, kind: input, shape index: {}]
  %s4 = inlined_call_operand.hbm [shape: f32[1,256], index: 4, kind: output, shape index: {}]
  %s5 = sld [smem:[#allocation0]]
  $region38: #{tpu_custom_call.1} parent=0
    _
  %s7 = ssub.s32 1, %s5
  %s8 = scalar_select 0, %s7, %s5
  $region1: #{tpu_custom_call.1} parent=0
    #allocation2 [shape = 'u8[512]{0}', space=vmem, size = 0x400, scoped, tag = 'input window, operand 0, single buffered']
    #allocation3 [shape = 's32[1]{0}', space=sflag, size = 0x4, scoped, tag = 'scoped memory for tpu_custom_call.1']
    #allocation4 [shape = 's32[1]{0}', space=sflag, size = 0x4, scoped, tag = 'scoped memory for tpu_custom_call.1']
    #allocation5 [shape = 'u8[131072]{0}', space=vmem, size = 0x20000, scoped, tag = 'input window, operand 1, single buffered']
    #allocation6 [shape = 's32[1]{0}', space=sflag, size = 0x4, scoped, tag = 'scoped memory for tpu_custom_call.1']
    #allocation7 [shape = 'u8[1024]{0}', space=vmem, size = 0x400, scoped, tag = 'input window, operand 2, single buffered']
    #allocation8 [shape = 'u8[1024]{0}', space=vmem, size = 0x400, scoped, tag = 'output window, operand 0, single buffered']
    %9 = vsyncpa [#allocation3], 0
    %10 = vsyncpa [#allocation6], 0
    %11 = vsyncpa [#allocation4], 0
    // Predicated region
    $region2: #{tpu_custom_call.1} parent=1 // pred_check
      _
    $region3: #{tpu_custom_call.1} parent=1 // pred_check_branch
      %13 = sbr.rel (0) target = $region5
    $region4: #{tpu_custom_call.1} parent=1 // pred_region
      %15 = vsyncadd [#allocation3], 0
      %s17 = sshll.u32 %s0, 4
      %s18 = int_to_ptr.hbm [resolvable:$true] %s17
      %s19 = sshll.u32 [#allocation2], 4
      %s20 = int_to_ptr.vmem [resolvable:$true] %s19
      %22 = dma.hbm_to_vmem [thread:$0]  %s18, 16, %s20, [#allocation3]
    $region5: #{tpu_custom_call.1} parent=1 // pred_fallthru
      _
    // Predicated region
    $region6: #{tpu_custom_call.1} parent=1 // pred_check
      _
    $region7: #{tpu_custom_call.1} parent=1 // pred_check_branch
      %24 = sbr.rel (0) target = $region9
    $region8: #{tpu_custom_call.1} parent=1 // pred_region
      %26 = vsyncadd [#allocation6], 0
      %s27 = sshll.u32 %s1, 4
      %s28 = int_to_ptr.hbm [resolvable:$true] %s27
      %s29 = sshll.u32 [#allocation5], 4
      %s30 = int_to_ptr.vmem [resolvable:$true] %s29
      %35 = dma.hbm_to_vmem [thread:$0]  %s28, 4096, %s30, [#allocation6], 256, 256, 16
    $region9: #{tpu_custom_call.1} parent=1 // pred_fallthru
      _
    // Predicated region
    $region10: #{tpu_custom_call.1} parent=1 // pred_check
      _
    $region11: #{tpu_custom_call.1} parent=1 // pred_check_branch
      %37 = sbr.rel (0) target = $region13
    $region12: #{tpu_custom_call.1} parent=1 // pred_region
      %39 = vsyncadd [#allocation6], 0
      %s41 = sshll.u32 %s2, 4
      %s42 = int_to_ptr.hbm [resolvable:$true] %s41
      %s43 = sshll.u32 [#allocation7], 4
      %s44 = int_to_ptr.vmem [resolvable:$true] %s43
      %46 = dma.hbm_to_vmem [thread:$0]  %s42, 32, %s44, [#allocation6]
    $region13: #{tpu_custom_call.1} parent=1 // pred_fallthru
      _
    // Predicated region
    $region14: #{tpu_custom_call.1} parent=1 // pred_check
      _
    $region15: #{tpu_custom_call.1} parent=1 // pred_check_branch
      %48 = sbr.rel (0) target = $region17
    $region16: #{tpu_custom_call.1} parent=1 // pred_region
      _
    $region17: #{tpu_custom_call.1} parent=1 // pred_fallthru
      _
    // Predicated region
    $region18: #{tpu_custom_call.1} parent=1 // pred_check
      _
    $region19: #{tpu_custom_call.1} parent=1 // pred_check_branch
      %50 = sbr.rel (0) target = $region21
    $region20: #{tpu_custom_call.1} parent=1 // pred_region
      %52 = dma.done [#allocation3], 16
    $region21: #{tpu_custom_call.1} parent=1 // pred_fallthru
      _
    // Predicated region
    $region22: #{tpu_custom_call.1} parent=1 // pred_check
      _
    $region23: #{tpu_custom_call.1} parent=1 // pred_check_branch
      %54 = sbr.rel (0) target = $region25
    $region24: #{tpu_custom_call.1} parent=1 // pred_region
      %56 = dma.done [#allocation6], 4096
    $region25: #{tpu_custom_call.1} parent=1 // pred_fallthru
      _
    // Predicated region
    $region26: #{tpu_custom_call.1} parent=1 // pred_check
      _
    $region27: #{tpu_custom_call.1} parent=1 // pred_check_branch
      %58 = sbr.rel (0) target = $region29
    $region28: #{tpu_custom_call.1} parent=1 // pred_region
      %60 = dma.done [#allocation6], 32
    $region29: #{tpu_custom_call.1} parent=1 // pred_fallthru
      _
    %v61 = vld [vmem:[#allocation2] sm:$0x1]
    %v62 = vld [vmem:[#allocation5] sm:$0xff]
    %v63 = vld [vmem:[#allocation5 + $0x8] sm:$0xff]
    %v64 = vld [vmem:[#allocation5 + $0x10] sm:$0xff]
    %v65 = vld [vmem:[#allocation5 + $0x18] sm:$0xff]
    %v66 = vld [vmem:[#allocation5 + $0x20] sm:$0xff]
    %v67 = vld [vmem:[#allocation5 + $0x28] sm:$0xff]
    %v68 = vld [vmem:[#allocation5 + $0x30] sm:$0xff]
    %v69 = vld [vmem:[#allocation5 + $0x38] sm:$0xff]
    %v70 = vld [vmem:[#allocation5 + $0x40] sm:$0xff]
    %v71 = vld [vmem:[#allocation5 + $0x48] sm:$0xff]
    %v72 = vld [vmem:[#allocation5 + $0x50] sm:$0xff]
    %v73 = vld [vmem:[#allocation5 + $0x58] sm:$0xff]
    %v74 = vld [vmem:[#allocation5 + $0x60] sm:$0xff]
    %v75 = vld [vmem:[#allocation5 + $0x68] sm:$0xff]
    %v76 = vld [vmem:[#allocation5 + $0x70] sm:$0xff]
    %v77 = vld [vmem:[#allocation5 + $0x78] sm:$0xff]
    %v78 = vld [vmem:[#allocation5 + $0x80] sm:$0xff]
    %v79 = vld [vmem:[#allocation5 + $0x88] sm:$0xff]
    %v80 = vld [vmem:[#allocation5 + $0x90] sm:$0xff]
    %v81 = vld [vmem:[#allocation5 + $0x98] sm:$0xff]
    %v82 = vld [vmem:[#allocation5 + $0xa0] sm:$0xff]
    %v83 = vld [vmem:[#allocation5 + $0xa8] sm:$0xff]
    %v84 = vld [vmem:[#allocation5 + $0xb0] sm:$0xff]
    %v85 = vld [vmem:[#allocation5 + $0xb8] sm:$0xff]
    %v86 = vld [vmem:[#allocation5 + $0xc0] sm:$0xff]
    %v87 = vld [vmem:[#allocation5 + $0xc8] sm:$0xff]
    %v88 = vld [vmem:[#allocation5 + $0xd0] sm:$0xff]
    %v89 = vld [vmem:[#allocation5 + $0xd8] sm:$0xff]
    %v90 = vld [vmem:[#allocation5 + $0xe0] sm:$0xff]
    %v91 = vld [vmem:[#allocation5 + $0xe8] sm:$0xff]
    %v92 = vld [vmem:[#allocation5 + $0xf0] sm:$0xff]
    %v93 = vld [vmem:[#allocation5 + $0xf8] sm:$0xff]
    %v94 = vld [vmem:[#allocation7] sm:$0x3]
    %v96 = vperm.slane %v94, 0
    %v97 = vperm.slane %v94, 1
    %100 = vmatpush.msra.mxu0 %v92
    %101 = vmatpush.msra.mxu0 %v90
    %102 = vmatpush.msra.mxu0 %v88
    %103 = vmatpush.msra.mxu0 %v86
    %104 = vmatpush.msra.mxu0 %v84
    %105 = vmatpush.msra.mxu0 %v82
    %106 = vmatpush.msra.mxu0 %v80
    %107 = vmatpush.msra.mxu0 %v78
    %108 = vmatpush.msra.mxu0 %v76
    %109 = vmatpush.msra.mxu0 %v74
    %110 = vmatpush.msra.mxu0 %v72
    %111 = vmatpush.msra.mxu0 %v70
    %112 = vmatpush.msra.mxu0 %v68
    %113 = vmatpush.msra.mxu0 %v66
    %114 = vmatpush.msra.mxu0 %v64
    %115 = vmatpush.msra.mxu0 %v62
    %116 = vmatmul.f32.gmra.mxu0 %v61
    %v117 = vpop.f32.mrf.mxu0
    %v118 = vadd.f32 %v96, %v117
    %119 = vdwg.mxu0
    %120 = vmatpush.msra.mxu0 %v93
    %121 = vmatpush.msra.mxu0 %v91
    %122 = vmatpush.msra.mxu0 %v89
    %123 = vmatpush.msra.mxu0 %v87
    %124 = vmatpush.msra.mxu0 %v85
    %125 = vmatpush.msra.mxu0 %v83
    %126 = vmatpush.msra.mxu0 %v81
    %127 = vmatpush.msra.mxu0 %v79
    %128 = vmatpush.msra.mxu0 %v77
    %129 = vmatpush.msra.mxu0 %v75
    %130 = vmatpush.msra.mxu0 %v73
    %131 = vmatpush.msra.mxu0 %v71
    %132 = vmatpush.msra.mxu0 %v69
    %133 = vmatpush.msra.mxu0 %v67
    %134 = vmatpush.msra.mxu0 %v65
    %135 = vmatpush.msra.mxu0 %v63
    %136 = vmatmul.f32.gmra.mxu0 %v61
    %v137 = vpop.f32.mrf.mxu0
    %v138 = vadd.f32 %v97, %v137
    %139 = vdwg.mxu0
    %v140 = vld [vmem:[%s3] sm:$0x3]
    %v142 = vperm.slane %v140, 0
    %v143 = vperm.slane %v140, 1
    %v146 = vadd.f32 %v118, %v142
    %v147 = vadd.f32 %v138, %v143
    %v148 = vmax.f32 %v146, 0.0
    %v149 = vmax.f32 %v147, 0.0
    %v152 = vrot.slane %v149, 7
    %vm153 = vcmask 1040384
    %v154 = vsel %vm153, %v148, %v152
    %v156 = vlaneseq
    %vm157 = vcmp.ge.s32.totalorder %v156, 0
    %vm158 = vcmp.lt.s32.totalorder %v156, 256
    %vm159 = vmand %vm157, %vm158
    %160 = vst.msk [vmem:[#allocation8] sm:$0x3] %vm159, %v154
    // Predicated region
    $region30: #{tpu_custom_call.1} parent=1 // pred_check
      _
    $region31: #{tpu_custom_call.1} parent=1 // pred_check_branch
      %162 = sbr.rel (0) target = $region33
    $region32: #{tpu_custom_call.1} parent=1 // pred_region
      %164 = vsyncadd [#allocation4], 0
      %s166 = sshll.u32 [#allocation8], 4
      %s167 = int_to_ptr.vmem [resolvable:$true] %s166
      %s168 = sshll.u32 %s4, 4
      %s169 = int_to_ptr.hbm [resolvable:$true] %s168
      %171 = dma.vmem_to_hbm [thread:$0]  %s167, 32, %s169, [#allocation4]
    $region33: #{tpu_custom_call.1} parent=1 // pred_fallthru
      _
    // Predicated region
    $region34: #{tpu_custom_call.1} parent=1 // pred_check
      _
    $region35: #{tpu_custom_call.1} parent=1 // pred_check_branch
      %173 = sbr.rel (0) target = $region37
    $region36: #{tpu_custom_call.1} parent=1 // pred_region
      %175 = dma.done [#allocation4], 32
    $region37: #{tpu_custom_call.1} parent=1 // pred_fallthru
      _
    %176 = vsyncpa [#allocation3], 1
    %177 = vsyncpa [#allocation6], 1
    %178 = vsyncpa [#allocation4], 1

</llo_original>
